<compile_context>
chip_gen: v5e
topology: v5e:2x2
jax: 0.10.0
libtpu: 0.0.40
codegen_flags: <defaults>
</compile_context>

<pallas_src>
import functools
import math

import jax
import jax.numpy as jnp
from jax.experimental import pallas as pl
from jax.experimental.pallas import tpu as pltpu

LANE = 128
_PATCH_BUDGET = 4 * 1024 * 1024   # bf16 bytes allowed for the fused conv patch per step
_M_CAP = 2048                     # max rows fed to one MXU call (bounds the f32 accumulator)


def _pad_to(n, m=LANE):
    return ((n + m - 1) // m) * m


def _pick_vmem_limit():
    # Generation-dependent scoped-VMEM budget.
    try:
        cap = int(pltpu.get_tpu_info().vmem_capacity_bytes)
    except Exception:
        cap = 128 * 1024 * 1024
    return int(min(cap - cap // 4, 100 * 1024 * 1024))


VMEM_LIMIT = _pick_vmem_limit()


def _leaky(v):
    # LeakyReLU(0.2) == max(x, 0.2*x); computed in the input dtype (bf16 in the
    # conv paths -> no f32 round trip on v6e/v7x's bf16 VALU; still exact sign-wise).
    return jnp.maximum(v, 0.2 * v)


def _avg_pool_2x2(v):
    """2x2 average pool over the two middle spatial axes of (..., H, W, C)."""
    *lead, H, W, C = v.shape
    v = v.reshape(*lead, H // 2, 2, W, C)
    v = v[..., 0, :, :] + v[..., 1, :, :]          # row pairs: leading-dim ops (cheap)
    v = v.reshape(*lead, H // 2, W // 2, 2, C)
    v = jnp.sum(v, axis=-2)                        # column pairs
    return v * 0.25


def _build_patch(xs, tile_ho, Wo):
    """xs: (tile_ho+2, Wo+2, Cp) -> (tile_ho*Wo, 9*Cp) patch, (dy, dx, ci) order.

    The 3 dx shifts are hoisted (built once, reused across dy); the dy folding
    is done with leading-dim slices, so the whole 3x3 conv becomes ONE matmul.
    """
    K = 3
    cin = xs.shape[-1]
    xcat = jnp.concatenate([xs[:, dx:dx + Wo, :] for dx in range(K)], axis=-1)
    patch = jnp.concatenate([xcat[dy:dy + tile_ho] for dy in range(K)], axis=-1)
    return patch.reshape(tile_ho * Wo, K * K * cin)


# ---------------------------------------------------------------------------
# Pallas kernels
# ---------------------------------------------------------------------------

def _conv0_kernel(x_ref, w_ref, b_ref, o_ref):
    """Layer-0: per-pixel matmul over the pre-im2col'd (dy,dx,ci)=27(->32) input."""
    bf, t, Wo, kc = x_ref.shape
    m = x_ref[...].reshape(bf * t * Wo, kc)
    acc = jnp.dot(m, w_ref[...], preferred_element_type=jnp.float32) + b_ref[...]
    o_ref[...] = acc.reshape(bf, t, Wo, -1).astype(o_ref.dtype)


def _res_conv1_kernel(*refs, bf, tile_ho, Wo, learned_sc):
    """ResBlk first half, fused:
         residual:  LeakyReLU -> 3x3 conv -> 2x2 avg-pool   (output 0)
         shortcut:  2x2 avg-pool (+ optional 1x1 conv)       (output 1)
       Both branches read the same resident input slab exactly once."""
    if learned_sc:
        x_ref, w_ref, b_ref, wsc_ref, o_ref, sc_ref = refs
    else:
        x_ref, w_ref, b_ref, o_ref, sc_ref = refs
    i = pl.program_id(1)
    rows = tile_ho + 2
    cin = x_ref.shape[-1]

    bands = [x_ref[b, pl.ds(i * tile_ho, rows)] for b in range(bf)]  # (rows, Wo+2, Cp)

    # ---- shortcut: pool the raw (un-activated) interior, then optional 1x1 ----
    x_in = jnp.stack([band[1:1 + tile_ho, 1:1 + Wo, :] for band in bands], axis=0)
    sc = _avg_pool_2x2(x_in.astype(jnp.float32))                     # (bf, t/2, Wo/2, Cp)
    if learned_sc:
        th, tw = sc.shape[1], sc.shape[2]
        scm = sc.astype(jnp.bfloat16).reshape(bf * th * tw, cin)
        scm = jnp.dot(scm, wsc_ref[...], preferred_element_type=jnp.float32)
        sc = scm.reshape(bf, th, tw, -1)
    sc_ref[...] = sc.astype(sc_ref.dtype)

    # ---- residual: LeakyReLU -> single fused-tap matmul -> bias -> pool ----
    patches = [_build_patch(_leaky(band), tile_ho, Wo) for band in bands]
    m = jnp.concatenate(patches, axis=0) if bf > 1 else patches[0]
    acc = jnp.dot(m, w_ref[...], preferred_element_type=jnp.float32) + b_ref[...]
    out = _avg_pool_2x2(acc.reshape(bf, tile_ho, Wo, -1))
    o_ref[...] = out.astype(o_ref.dtype)


def _res_conv2_kernel(x_ref, w_ref, b_ref, sc_ref, o_ref, *, bf, tile_ho, Wo):
    """ResBlk second half: LeakyReLU -> 3x3 conv -> (+shortcut) / sqrt(2)."""
    i = pl.program_id(1)
    rows = tile_ho + 2
    bands = [_leaky(x_ref[b, pl.ds(i * tile_ho, rows)]) for b in range(bf)]
    patches = [_build_patch(band, tile_ho, Wo) for band in bands]
    m = jnp.concatenate(patches, axis=0) if bf > 1 else patches[0]
    acc = jnp.dot(m, w_ref[...], preferred_element_type=jnp.float32) + b_ref[...]
    out = acc.reshape(bf, tile_ho, Wo, -1)
    out = (out + sc_ref[...].astype(jnp.float32)) * (1.0 / math.sqrt(2.0))
    o_ref[...] = out.astype(o_ref.dtype)


def _head_kernel(h_ref, w4_ref, b4_ref, wu_ref, bu_ref, o_ref):
    """Fused tail, batched over all N samples:
       LeakyReLU -> 4x4 valid conv (as (N,16C)@(16C,C)) -> LeakyReLU
       -> all-domain style heads (as (N,C)@(C, pad(D*S)))."""
    h = _leaky(h_ref[...])                                            # bf16
    t = jnp.dot(h, w4_ref[...], preferred_element_type=jnp.float32) + b4_ref[...]
    t = _leaky(t).astype(jnp.bfloat16)
    o_ref[...] = jnp.dot(t, wu_ref[...],
                         preferred_element_type=jnp.float32) + bu_ref[...]


# ---------------------------------------------------------------------------
# Tiling heuristics
# ---------------------------------------------------------------------------

def _divisors_desc(n):
    return [d for d in range(n, 0, -1) if n % d == 0]


def _pick_conv_tiling(N, Ho, Wo, Cp, pool):
    """Row tile t (divides Ho, even when pooling) and batch fold bf (divides N)."""
    t = 2 if pool else 1
    for d in _divisors_desc(Ho):
        if pool and d % 2:
            continue
        if d * Wo * 9 * Cp * 2 <= _PATCH_BUDGET:
            t = d
            break
    bf = 1
    if t == Ho:  # whole feature map per step -> fold batch to keep the MXU fed
        for d in _divisors_desc(N):
            if d * Ho * Wo <= _M_CAP and d * Ho * Wo * 9 * Cp * 2 <= _PATCH_BUDGET:
                bf = d
                break
    return t, bf


def _pick_rows_nohalo(N, H, W, KC):
    t = 1
    for d in _divisors_desc(H):
        if d * W * KC * 2 <= _PATCH_BUDGET:
            t = d
            break
    bf = 1
    if t == H:
        for d in _divisors_desc(N):
            if d * H * W <= _M_CAP and d * H * W * KC * 2 <= _PATCH_BUDGET:
                bf = d
                break
    return t, bf


# ---------------------------------------------------------------------------
# Pallas-call wrappers
# ---------------------------------------------------------------------------

def conv0(x27, w0, b0):
    """Layer-0 conv on the im2col'd input.  x27: (N, H, W, 32) bf16."""
    N, H, W, KC = x27.shape
    cout = w0.shape[-1]
    t, bf = _pick_rows_nohalo(N, H, W, KC)
    grid = (N // bf, H // t)
    return pl.pallas_call(
        _conv0_kernel,
        out_shape=jax.ShapeDtypeStruct((N, H, W, cout), jnp.bfloat16),
        grid=grid,
        in_specs=[
            pl.BlockSpec((bf, t, W, KC), lambda n, i: (n, i, 0, 0)),
            pl.BlockSpec(w0.shape, lambda n, i: (0, 0)),
            pl.BlockSpec((1, cout), lambda n, i: (0, 0)),
        ],
        out_specs=pl.BlockSpec((bf, t, W, cout), lambda n, i: (n, i, 0, 0)),
        compiler_params=pltpu.CompilerParams(
            dimension_semantics=("parallel", "parallel"),
            vmem_limit_bytes=VMEM_LIMIT),
    )(x27, w0, b0)


def res_conv1(x, w1, b1, wsc):
    """Fused first half of a ResBlk.  Returns (residual_after_pool, shortcut)."""
    N, H, W, Cp = x.shape
    cout1 = w1.shape[-1]
    sc_cout = wsc.shape[-1] if wsc is not None else Cp
    xp = jnp.pad(x, ((0, 0), (1, 1), (1, 1), (0, 0)))   # zero 'same' padding
    Hp, Wp = H + 2, W + 2
    t, bf = _pick_conv_tiling(N, H, W, Cp, pool=True)
    grid = (N // bf, H // t)

    # TODO(synk): at production 256x256 the full padded-image resident block is
    # ~17 MB; switch the image input to row-band halo DMA (memory_space=pl.ANY
    # + make_async_copy) to fit v7x's 64 MiB VMEM with more headroom.
    in_specs = [
        pl.BlockSpec((bf, Hp, Wp, Cp), lambda n, i: (n, 0, 0, 0)),   # resident per batch blk
        pl.BlockSpec(w1.shape, lambda n, i: (0, 0)),                 # resident weights
        pl.BlockSpec((1, cout1), lambda n, i: (0, 0)),
    ]
    args = [xp, w1, b1]
    if wsc is not None:
        in_specs.append(pl.BlockSpec(wsc.shape, lambda n, i: (0, 0)))
        args.append(wsc)

    kern = functools.partial(_res_conv1_kernel, bf=bf, tile_ho=t, Wo=W,
                             learned_sc=wsc is not None)
    return pl.pallas_call(
        kern,
        out_shape=(jax.ShapeDtypeStruct((N, H // 2, W // 2, cout1), jnp.bfloat16),
                   jax.ShapeDtypeStruct((N, H // 2, W // 2, sc_cout), jnp.bfloat16)),
        grid=grid,
        in_specs=in_specs,
        out_specs=(pl.BlockSpec((bf, t // 2, W // 2, cout1), lambda n, i: (n, i, 0, 0)),
                   pl.BlockSpec((bf, t // 2, W // 2, sc_cout), lambda n, i: (n, i, 0, 0))),
        compiler_params=pltpu.CompilerParams(
            dimension_semantics=("parallel", "parallel"),
            vmem_limit_bytes=VMEM_LIMIT),
    )(*args)


def res_conv2(x, w2, b2, sc):
    """Second half of a ResBlk: actv -> conv2, merged with the shortcut."""
    N, H, W, Cp = x.shape
    cout = w2.shape[-1]
    xp = jnp.pad(x, ((0, 0), (1, 1), (1, 1), (0, 0)))
    Hp, Wp = H + 2, W + 2
    t, bf = _pick_conv_tiling(N, H, W, Cp, pool=False)
    grid = (N // bf, H // t)
    kern = functools.partial(_res_conv2_kernel, bf=bf, tile_ho=t, Wo=W)
    return pl.pallas_call(
        kern,
        out_shape=jax.ShapeDtypeStruct((N, H, W, cout), jnp.bfloat16),
        grid=grid,
        in_specs=[
            pl.BlockSpec((bf, Hp, Wp, Cp), lambda n, i: (n, 0, 0, 0)),
            pl.BlockSpec(w2.shape, lambda n, i: (0, 0)),
            pl.BlockSpec((1, cout), lambda n, i: (0, 0)),
            pl.BlockSpec((bf, t, W, cout), lambda n, i: (n, i, 0, 0)),
        ],
        out_specs=pl.BlockSpec((bf, t, W, cout), lambda n, i: (n, i, 0, 0)),
        compiler_params=pltpu.CompilerParams(
            dimension_semantics=("parallel", "parallel"),
            vmem_limit_bytes=VMEM_LIMIT),
    )(xp, w2, b2, sc)


def style_head(hf, w4f, b4, wu, bu):
    """hf: (N, 16*Cp) bf16 -> (N, pad(D*S)) f32 (all domains, lane-dense)."""
    N, KC = hf.shape
    C = w4f.shape[-1]
    DS = wu.shape[-1]
    return pl.pallas_call(
        _head_kernel,
        out_shape=jax.ShapeDtypeStruct((N, DS), jnp.float32),
        grid=(1,),
        in_specs=[
            pl.BlockSpec((N, KC), lambda i: (0, 0)),
            pl.BlockSpec((KC, C), lambda i: (0, 0)),
            pl.BlockSpec((1, C), lambda i: (0, 0)),
            pl.BlockSpec((C, DS), lambda i: (0, 0)),
            pl.BlockSpec((1, DS), lambda i: (0, 0)),
        ],
        out_specs=pl.BlockSpec((N, DS), lambda i: (0, 0)),
        compiler_params=pltpu.CompilerParams(
            dimension_semantics=("arbitrary",),
            vmem_limit_bytes=VMEM_LIMIT),
    )(hf, w4f, b4, wu, bu)


# ---------------------------------------------------------------------------
# Parameters (logical f32) and kernel-ready packing (padded + bf16)
# ---------------------------------------------------------------------------

def init_params(key, *, dim_in, repeat_num, max_conv_dim, style_dim, num_domains):
    keys = iter(jax.random.split(key, 64))

    def conv_w(k, ci, co):
        fan_in = k * k * ci
        return math.sqrt(2.0 / fan_in) * jax.random.normal(
            next(keys), (k, k, ci, co), jnp.float32)

    def bias(co):
        return 0.1 * jax.random.normal(next(keys), (co,), jnp.float32)

    p = {"w0": conv_w(3, 3, dim_in), "b0": bias(dim_in), "blocks": []}
    d = dim_in
    for _ in range(repeat_num):
        d_out = min(d * 2, max_conv_dim)
        blk = {"w1": conv_w(3, d, d), "b1": bias(d),
               "w2": conv_w(3, d, d_out), "b2": bias(d_out),
               "learned_sc": d != d_out}
        if blk["learned_sc"]:
            blk["wsc"] = conv_w(1, d, d_out)          # bias-free 1x1 conv
        p["blocks"].append(blk)
        d = d_out
    p["w4"] = conv_w(4, d, d)
    p["b4"] = bias(d)
    p["wu"] = math.sqrt(1.0 / d) * jax.random.normal(
        next(keys), (num_domains, style_dim, d), jnp.float32)   # (D, S, d)
    p["bu"] = 0.1 * jax.random.normal(next(keys), (num_domains, style_dim),
                                      jnp.float32)
    return p, d


def _pack_conv_flat(w, b):
    """(K1,K2,ci,co) -> ((K1*K2*Cp), Cop) bf16 weight (dy,dx,ci flatten) + (1,Cop) f32 bias."""
    K1, K2, ci, co = w.shape
    cip, cop = _pad_to(ci), _pad_to(co)
    wp = jnp.zeros((K1, K2, cip, cop), jnp.float32).at[:, :, :ci, :co].set(w)
    bk = jnp.zeros((1, cop), jnp.float32).at[0, :co].set(b)
    return wp.reshape(K1 * K2 * cip, cop).astype(jnp.bfloat16), bk


def _pack_conv0(w, b):
    """Layer-0 weight: (3,3,3,co) -> (pad8(27), Cop); only 27 rows are real."""
    K1, K2, ci, co = w.shape
    cop = _pad_to(co)
    kc = K1 * K2 * ci
    kcp = _pad_to(kc, 8)
    wk = jnp.zeros((kcp, cop), jnp.float32).at[:kc, :co].set(w.reshape(kc, co))
    bk = jnp.zeros((1, cop), jnp.float32).at[0, :co].set(b)
    return wk.astype(jnp.bfloat16), bk


def _pack_conv1x1(w):
    ci, co = w.shape[2], w.shape[3]
    cip, cop = _pad_to(ci), _pad_to(co)
    return (jnp.zeros((cip, cop), jnp.float32).at[:ci, :co].set(w[0, 0])
            .astype(jnp.bfloat16))


def prepare_kernel_params(p):
    kp = {"blocks": []}
    kp["w0"], kp["b0"] = _pack_conv0(p["w0"], p["b0"])
    for blk in p["blocks"]:
        kb = {}
        kb["w1"], kb["b1"] = _pack_conv_flat(blk["w1"], blk["b1"])
        kb["w2"], kb["b2"] = _pack_conv_flat(blk["w2"], blk["b2"])
        kb["wsc"] = _pack_conv1x1(blk["wsc"]) if blk["learned_sc"] else None
        kp["blocks"].append(kb)

    kp["w4f"], kp["b4"] = _pack_conv_flat(p["w4"], p["b4"])      # (16*Cp, Cp)

    D, S, d = p["wu"].shape
    dp, dsp = _pad_to(d), _pad_to(D * S)
    wu = jnp.zeros((dp, dsp), jnp.float32)
    bu = jnp.zeros((1, dsp), jnp.float32)
    for k in range(D):
        wu = wu.at[:d, k * S:(k + 1) * S].set(p["wu"][k].T)
        bu = bu.at[0, k * S:(k + 1) * S].set(p["bu"][k])
    kp["wu"] = wu.astype(jnp.bfloat16)
    kp["bu"] = bu
    kp["num_domains"] = D
    kp["style_dim"] = S
    return kp


def _im2col_rgb(x, kcp):
    """Layer-0 glue: (N,H,W,3) f32 -> (N,H,W,kcp) bf16 with (dy,dx,ci) tap channels."""
    N, H, W, _ = x.shape
    xp = jnp.pad(x, ((0, 0), (1, 1), (1, 1), (0, 0)))
    taps = [xp[:, dy:dy + H, dx:dx + W, :] for dy in range(3) for dx in range(3)]
    pat = jnp.concatenate(taps, axis=-1)                         # (N, H, W, 27)
    pat = jnp.pad(pat, ((0, 0), (0, 0), (0, 0), (0, kcp - pat.shape[-1])))
    return pat.astype(jnp.bfloat16)


# ---------------------------------------------------------------------------
# Forward pass
# ---------------------------------------------------------------------------

def style_encoder_forward(kp, x, y):
    N = x.shape[0]
    x27 = _im2col_rgb(x, kp["w0"].shape[0])                      # tiny 3->27ch im2col
    h = conv0(x27, kp["w0"], kp["b0"])
    for kb in kp["blocks"]:
        r, sc = res_conv1(h, kb["w1"], kb["b1"], kb["wsc"])      # actv->conv1->pool + fused shortcut
        h = res_conv2(r, kb["w2"], kb["b2"], sc)                 # actv->conv2, +sc, /sqrt2

    n, hh, ww, cc = h.shape
    hf = h.reshape(n, hh * ww * cc)
    assert hf.shape[1] == kp["w4f"].shape[0]
    out = style_head(hf, kp["w4f"], kp["b4"], kp["wu"], kp["bu"])   # (N, pad(D*S))
    D, S = kp["num_domains"], kp["style_dim"]
    out = out[:, :D * S].reshape(N, D, S)
    return out[jnp.arange(N), y]           # tiny per-sample domain gather (glue)


# ---------------------------------------------------------------------------
# Pure-JAX f32 reference (spec) for correctness checking
# ---------------------------------------------------------------------------

def _leaky_f32(v):
    return jnp.where(v >= 0.0, v, 0.2 * v)


def _ref_conv(x, w, b, pad):
    out = jax.lax.conv_general_dilated(
        x, w, window_strides=(1, 1), padding=[(pad, pad), (pad, pad)],
        dimension_numbers=("NHWC", "HWIO", "NHWC"),
        precision=jax.lax.Precision.HIGHEST)
    return out + b.reshape(1, 1, 1, -1)


def _ref_pool(x):
    N, H, W, C = x.shape
    return x.reshape(N, H // 2, 2, W // 2, 2, C).mean(axis=(2, 4))


def reference_forward(params, x, y):
    h = _ref_conv(x, params["w0"], params["b0"], 1)
    for blk in params["blocks"]:
        sc = h
        if blk["learned_sc"]:
            sc = jax.lax.conv_general_dilated(
                sc, blk["wsc"], (1, 1), [(0, 0), (0, 0)],
                dimension_numbers=("NHWC", "HWIO", "NHWC"),
                precision=jax.lax.Precision.HIGHEST)
        sc = _ref_pool(sc)
        r = _ref_conv(_leaky_f32(h), blk["w1"], blk["b1"], 1)
        r = _ref_pool(r)
        r = _ref_conv(_leaky_f32(r), blk["w2"], blk["b2"], 1)
        h = (sc + r) / math.sqrt(2.0)
    h = _ref_conv(_leaky_f32(h), params["w4"], params["b4"], 0)
    h = _leaky_f32(h).reshape(h.shape[0], -1)
    out = jnp.einsum("nd,ksd->nks", h, params["wu"]) + params["bu"][None]
    return out[jnp.arange(y.shape[0]), y]


# ---------------------------------------------------------------------------
# Main
# ---------------------------------------------------------------------------

if __name__ == "__main__":
    key = jax.random.PRNGKey(0)
    kx, ky, kparam = jax.random.split(key, 3)

    N, IMG = 2, 16
    # Small-shape config consistent with the module structure (the original
    # formula dim_in = 2**14 // img_size is overridden for a demo).
    dim_in, max_conv_dim, style_dim, num_domains = 8, 32, 16, 2
    repeat_num = int(math.log2(IMG)) - 2          # 2 ResBlks: 16 -> 8 -> 4

    params, dim_out = init_params(
        kparam, dim_in=dim_in, repeat_num=repeat_num, max_conv_dim=max_conv_dim,
        style_dim=style_dim, num_domains=num_domains)
    kparams = prepare_kernel_params(params)

    x = jax.random.normal(kx, (N, IMG, IMG, 3), jnp.float32)   # NHWC
    y = jax.random.randint(ky, (N,), 0, num_domains, jnp.int32)

    s = style_encoder_forward(kparams, x, y)
    s = jax.block_until_ready(s)
    assert s.shape == (N, style_dim)

    s_ref = reference_forward(params, x, y)
    err = float(jnp.max(jnp.abs(s - s_ref)))
    scale = float(jnp.max(jnp.abs(s_ref))) + 1e-6
    assert err <= 0.05 * scale + 1e-3, f"max abs err {err} vs ref scale {scale}"

    print("KERNEL_OK")
</pallas_src>

<mosaic_0001>
module attributes {stable_mosaic.version = 11 : i64} {
  func.func @_conv0_kernel(%arg0: i32, %arg1: i32, %arg2: memref<2x16x16x32xbf16, #tpu.memory_space<vmem>>, %arg3: memref<32x128xbf16, #tpu.memory_space<vmem>>, %arg4: memref<1x128xf32, #tpu.memory_space<vmem>>, %arg5: memref<2x16x16x128xbf16, #tpu.memory_space<vmem>>) attributes {dimension_semantics = [#tpu.dimension_semantics<parallel>, #tpu.dimension_semantics<parallel>], iteration_bounds = array<i64: 1, 1>, scalar_prefetch = 0 : i64, scratch_operands = 0 : i64, tpu.core_type = #tpu.core_type<tc>, window_params = [{transform_indices = @transform_0, window_bounds = array<i64: 2, 16, 16, 32>}, {pipeline_mode = #tpu.pipeline_mode<synchronous>, transform_indices = @transform_1, window_bounds = array<i64: 32, 128>}, {pipeline_mode = #tpu.pipeline_mode<synchronous>, transform_indices = @transform_2, window_bounds = array<i64: 1, 128>}, {transform_indices = @transform_3, window_bounds = array<i64: 2, 16, 16, 128>}]} {
    %c0 = arith.constant 0 : index
    %c0_0 = arith.constant 0 : index
    %c0_1 = arith.constant 0 : index
    %c0_2 = arith.constant 0 : index
    %0 = vector.load %arg2[%c0, %c0_0, %c0_1, %c0_2] : memref<2x16x16x32xbf16, #tpu.memory_space<vmem>>, vector<2x16x16x32xbf16>
    %1 = vector.shape_cast %0 : vector<2x16x16x32xbf16> to vector<512x32xbf16>
    %c0_3 = arith.constant 0 : index
    %c0_4 = arith.constant 0 : index
    %2 = vector.load %arg3[%c0_3, %c0_4] : memref<32x128xbf16, #tpu.memory_space<vmem>>, vector<32x128xbf16>
    %cst = arith.constant dense<0.000000e+00> : vector<512x128xf32>
    %3 = tpu.matmul %1, %2, %cst {dimension_numbers = #tpu.dot_dimension_numbers<[1], [0], [0], [1], [0, 0, 1, 1], [], []>} : vector<512x32xbf16>, vector<32x128xbf16>, vector<512x128xf32> -> vector<512x128xf32>
    %c0_5 = arith.constant 0 : index
    %c0_6 = arith.constant 0 : index
    %4 = vector.load %arg4[%c0_5, %c0_6] : memref<1x128xf32, #tpu.memory_space<vmem>>, vector<1x128xf32>
    %5 = vector.broadcast %4 : vector<1x128xf32> to vector<512x128xf32>
    %6 = arith.addf %3, %5 : vector<512x128xf32>
    %7 = vector.shape_cast %6 : vector<512x128xf32> to vector<2x16x16x128xf32>
    %8 = arith.truncf %7 : vector<2x16x16x128xf32> to vector<2x16x16x128xbf16>
    %c0_7 = arith.constant 0 : index
    %c0_8 = arith.constant 0 : index
    %c0_9 = arith.constant 0 : index
    %c0_10 = arith.constant 0 : index
    %9 = vector.load %arg5[%c0_7, %c0_8, %c0_9, %c0_10] : memref<2x16x16x128xbf16, #tpu.memory_space<vmem>>, vector<2x16x16x128xbf16>
    tpu.vector_store %arg5[%c0_7, %c0_8, %c0_9, %c0_10], %8 {strides = array<i32>} : memref<2x16x16x128xbf16, #tpu.memory_space<vmem>>, vector<2x16x16x128xbf16>,
    return
  }
  func.func @transform_0(%arg0: i32, %arg1: i32) -> (i32, i32, i32, i32) {
    %c0_i32 = arith.constant 0 : i32
    %c0_i32_0 = arith.constant 0 : i32
    %c0_i32_1 = arith.constant 0 : i32
    return %arg0, %arg1, %c0_i32, %c0_i32_0 : i32, i32, i32, i32
  }
  func.func @transform_1(%arg0: i32, %arg1: i32) -> (i32, i32) {
    %c0_i32 = arith.constant 0 : i32
    %c0_i32_0 = arith.constant 0 : i32
    %c0_i32_1 = arith.constant 0 : i32
    return %c0_i32, %c0_i32_0 : i32, i32
  }
  func.func @transform_2(%arg0: i32, %arg1: i32) -> (i32, i32) {
    %c0_i32 = arith.constant 0 : i32
    %c0_i32_0 = arith.constant 0 : i32
    %c0_i32_1 = arith.constant 0 : i32
    return %c0_i32, %c0_i32_0 : i32, i32
  }
  func.func @transform_3(%arg0: i32, %arg1: i32) -> (i32, i32, i32, i32) {
    %c0_i32 = arith.constant 0 : i32
    %c0_i32_0 = arith.constant 0 : i32
    %c0_i32_1 = arith.constant 0 : i32
    return %arg0, %arg1, %c0_i32, %c0_i32_0 : i32, i32, i32, i32
  }
}

</mosaic_0001>

<llo_original>
// kernel: tpu_custom_call.1
$region0: #{tpu_custom_call.1}
  #allocation0 [shape = 'u32[]', space=smem, size = 0x4, offset = 0x4, fixed_abs, tag = 'smem constant byte address 0x4 - core index']
  #allocation1 [shape = 'u32[72,128]{1,0:T(1,128)}', space=vmem, size = 0x9000, scoped, tag = 'internal scratch']
  %s0 = inlined_call_operand.hbm [shape: bf16[2,16,16,32], index: 0, kind: input, shape index: {}]
  %s1 = inlined_call_operand.hbm [shape: bf16[32,128], index: 1, kind: input, shape index: {}]
  %s2 = inlined_call_operand.vmem [shape: f32[1,128], index: 2, kind: input, shape index: {}]
  %s3 = inlined_call_operand.hbm [shape: bf16[2,16,16,128], index: 3, kind: output, shape index: {}]
  %s4 = sld [smem:[#allocation0]]
  $region30: #{tpu_custom_call.1} parent=0
    _
  %s6 = ssub.s32 1, %s4
  %s7 = scalar_select 0, %s6, %s4
  $region1: #{tpu_custom_call.1} parent=0
    #allocation2 [shape = 'u8[131072]{0}', space=vmem, size = 0x20000, scoped, tag = 'input window, operand 0, single buffered']
    #allocation3 [shape = 's32[1]{0}', space=sflag, size = 0x4, scoped, tag = 'scoped memory for tpu_custom_call.1']
    #allocation4 [shape = 's32[1]{0}', space=sflag, size = 0x4, scoped, tag = 'scoped memory for tpu_custom_call.1']
    #allocation5 [shape = 'u8[8192]{0}', space=vmem, size = 0x2000, scoped, tag = 'input window, operand 1, single buffered']
    #allocation6 [shape = 's32[1]{0}', space=sflag, size = 0x4, scoped, tag = 'scoped memory for tpu_custom_call.1']
    #allocation7 [shape = 'u8[131072]{0}', space=vmem, size = 0x20000, scoped, tag = 'output window, operand 0, single buffered']
    %8 = vsyncpa [#allocation3], 0
    %9 = vsyncpa [#allocation6], 0
    %10 = vsyncpa [#allocation4], 0
    // Predicated region
    $region2: #{tpu_custom_call.1} parent=1 // pred_check
      _
    $region3: #{tpu_custom_call.1} parent=1 // pred_check_branch
      %12 = sbr.rel (0) target = $region5
    $region4: #{tpu_custom_call.1} parent=1 // pred_region
      %14 = vsyncadd [#allocation3], 0
      %s15 = sshll.u32 %s0, 4
      %s16 = int_to_ptr.hbm [resolvable:$true] %s15
      %s17 = sshll.u32 [#allocation2], 4
      %s18 = int_to_ptr.vmem [resolvable:$true] %s17
      %23 = dma.hbm_to_vmem [thread:$0]  %s16, 4096, %s18, [#allocation3], 64, 64, 4
    $region5: #{tpu_custom_call.1} parent=1 // pred_fallthru
      _
    // Predicated region
    $region6: #{tpu_custom_call.1} parent=1 // pred_check
      _
    $region7: #{tpu_custom_call.1} parent=1 // pred_check_branch
      %25 = sbr.rel (0) target = $region9
    $region8: #{tpu_custom_call.1} parent=1 // pred_region
      %27 = vsyncadd [#allocation6], 0
      %s28 = sshll.u32 %s1, 4
      %s29 = int_to_ptr.hbm [resolvable:$true] %s28
      %s30 = sshll.u32 [#allocation5], 4
      %s31 = int_to_ptr.vmem [resolvable:$true] %s30
      %36 = dma.hbm_to_vmem [thread:$0]  %s29, 256, %s31, [#allocation6], 64, 64, 4
    $region9: #{tpu_custom_call.1} parent=1 // pred_fallthru
      _
    // Predicated region
    $region10: #{tpu_custom_call.1} parent=1 // pred_check
      _
    $region11: #{tpu_custom_call.1} parent=1 // pred_check_branch
      %38 = sbr.rel (0) target = $region13
    $region12: #{tpu_custom_call.1} parent=1 // pred_region
      _
    $region13: #{tpu_custom_call.1} parent=1 // pred_fallthru
      _
    // Predicated region
    $region14: #{tpu_custom_call.1} parent=1 // pred_check
      _
    $region15: #{tpu_custom_call.1} parent=1 // pred_check_branch
      %40 = sbr.rel (0) target = $region17
    $region16: #{tpu_custom_call.1} parent=1 // pred_region
      %42 = dma.done [#allocation3], 4096
    $region17: #{tpu_custom_call.1} parent=1 // pred_fallthru
      _
    // Predicated region
    $region18: #{tpu_custom_call.1} parent=1 // pred_check
      _
    $region19: #{tpu_custom_call.1} parent=1 // pred_check_branch
      %44 = sbr.rel (0) target = $region21
    $region20: #{tpu_custom_call.1} parent=1 // pred_region
      %46 = dma.done [#allocation6], 256
    $region21: #{tpu_custom_call.1} parent=1 // pred_fallthru
      _
    %v48 = vld [vmem:[#allocation2] sm:$0xf]
    %v49 = vld [vmem:[#allocation2 + $0x4] sm:$0xf]
    %v50 = vld [vmem:[#allocation2 + $0x8] sm:$0xf]
    %v51 = vld [vmem:[#allocation2 + $0xc] sm:$0xf]
    %v52 = vld [vmem:[#allocation2 + $0x10] sm:$0xf]
    %v53 = vld [vmem:[#allocation2 + $0x14] sm:$0xf]
    %v54 = vld [vmem:[#allocation2 + $0x18] sm:$0xf]
    %v55 = vld [vmem:[#allocation2 + $0x1c] sm:$0xf]
    %v56 = vld [vmem:[#allocation2 + $0x20] sm:$0xf]
    %v57 = vld [vmem:[#allocation2 + $0x24] sm:$0xf]
    %v58 = vld [vmem:[#allocation2 + $0x28] sm:$0xf]
    %v59 = vld [vmem:[#allocation2 + $0x2c] sm:$0xf]
    %v60 = vld [vmem:[#allocation2 + $0x30] sm:$0xf]
    %v61 = vld [vmem:[#allocation2 + $0x34] sm:$0xf]
    %v62 = vld [vmem:[#allocation2 + $0x38] sm:$0xf]
    %v63 = vld [vmem:[#allocation2 + $0x3c] sm:$0xf]
    %v64 = vld [vmem:[#allocation2 + $0x40] sm:$0xf]
    %v65 = vld [vmem:[#allocation2 + $0x44] sm:$0xf]
    %v66 = vld [vmem:[#allocation2 + $0x48] sm:$0xf]
    %v67 = vld [vmem:[#allocation2 + $0x4c] sm:$0xf]
    %v68 = vld [vmem:[#allocation2 + $0x50] sm:$0xf]
    %v69 = vld [vmem:[#allocation2 + $0x54] sm:$0xf]
    %v70 = vld [vmem:[#allocation2 + $0x58] sm:$0xf]
    %v71 = vld [vmem:[#allocation2 + $0x5c] sm:$0xf]
    %v72 = vld [vmem:[#allocation2 + $0x60] sm:$0xf]
    %v73 = vld [vmem:[#allocation2 + $0x64] sm:$0xf]
    %v74 = vld [vmem:[#allocation2 + $0x68] sm:$0xf]
    %v75 = vld [vmem:[#allocation2 + $0x6c] sm:$0xf]
    %v76 = vld [vmem:[#allocation2 + $0x70] sm:$0xf]
    %v77 = vld [vmem:[#allocation2 + $0x74] sm:$0xf]
    %v78 = vld [vmem:[#allocation2 + $0x78] sm:$0xf]
    %v79 = vld [vmem:[#allocation2 + $0x7c] sm:$0xf]
    %v80 = vld [vmem:[#allocation2 + $0x80] sm:$0xf]
    %v81 = vld [vmem:[#allocation2 + $0x84] sm:$0xf]
    %v82 = vld [vmem:[#allocation2 + $0x88] sm:$0xf]
    %v83 = vld [vmem:[#allocation2 + $0x8c] sm:$0xf]
    %v84 = vld [vmem:[#allocation2 + $0x90] sm:$0xf]
    %v85 = vld [vmem:[#allocation2 + $0x94] sm:$0xf]
    %v86 = vld [vmem:[#allocation2 + $0x98] sm:$0xf]
    %v87 = vld [vmem:[#allocation2 + $0x9c] sm:$0xf]
    %v88 = vld [vmem:[#allocation2 + $0xa0] sm:$0xf]
    %v89 = vld [vmem:[#allocation2 + $0xa4] sm:$0xf]
    %v90 = vld [vmem:[#allocation2 + $0xa8] sm:$0xf]
    %v91 = vld [vmem:[#allocation2 + $0xac] sm:$0xf]
    %v92 = vld [vmem:[#allocation2 + $0xb0] sm:$0xf]
    %v93 = vld [vmem:[#allocation2 + $0xb4] sm:$0xf]
    %v94 = vld [vmem:[#allocation2 + $0xb8] sm:$0xf]
    %v95 = vld [vmem:[#allocation2 + $0xbc] sm:$0xf]
    %v96 = vld [vmem:[#allocation2 + $0xc0] sm:$0xf]
    %v97 = vld [vmem:[#allocation2 + $0xc4] sm:$0xf]
    %v98 = vld [vmem:[#allocation2 + $0xc8] sm:$0xf]
    %v99 = vld [vmem:[#allocation2 + $0xcc] sm:$0xf]
    %v100 = vld [vmem:[#allocation2 + $0xd0] sm:$0xf]
    %v101 = vld [vmem:[#allocation2 + $0xd4] sm:$0xf]
    %v102 = vld [vmem:[#allocation2 + $0xd8] sm:$0xf]
    %v103 = vld [vmem:[#allocation2 + $0xdc] sm:$0xf]
    %v104 = vld [vmem:[#allocation2 + $0xe0] sm:$0xf]
    %v105 = vld [vmem:[#allocation2 + $0xe4] sm:$0xf]
    %v106 = vld [vmem:[#allocation2 + $0xe8] sm:$0xf]
    %v107 = vld [vmem:[#allocation2 + $0xec] sm:$0xf]
    %v108 = vld [vmem:[#allocation2 + $0xf0] sm:$0xf]
    %v109 = vld [vmem:[#allocation2 + $0xf4] sm:$0xf]
    %v110 = vld [vmem:[#allocation2 + $0xf8] sm:$0xf]
    %v111 = vld [vmem:[#allocation2 + $0xfc] sm:$0xf]
    %v112 = vld [vmem:[#allocation5] sm:$0xf]
    %v113 = vld [vmem:[#allocation5 + $0x4] sm:$0xf]
    %v114 = vld [vmem:[#allocation5 + $0x8] sm:$0xf]
    %v115 = vld [vmem:[#allocation5 + $0xc] sm:$0xf]
    %v116 = vld [vmem:[%s2] sm:$0x1]
    %v118 = vperm.slane %v116, 0
    %v184 = vunpack.c.l.b16 %v48
    %v185 = vunpack.c.l.b16 %v49
    %v186 = vunpack.c.l.b16 %v50
    %v187 = vunpack.c.l.b16 %v51
    %v188 = vunpack.c.l.b16 %v52
    %v189 = vunpack.c.l.b16 %v53
    %v190 = vunpack.c.l.b16 %v54
    %v191 = vunpack.c.l.b16 %v55
    %v192 = vunpack.c.l.b16 %v56
    %v193 = vunpack.c.l.b16 %v57
    %v194 = vunpack.c.l.b16 %v58
    %v195 = vunpack.c.l.b16 %v59
    %v196 = vunpack.c.l.b16 %v60
    %v197 = vunpack.c.l.b16 %v61
    %v198 = vunpack.c.l.b16 %v62
    %v199 = vunpack.c.l.b16 %v63
    %v200 = vunpack.c.l.b16 %v64
    %v201 = vunpack.c.l.b16 %v65
    %v202 = vunpack.c.l.b16 %v66
    %v203 = vunpack.c.l.b16 %v67
    %v204 = vunpack.c.l.b16 %v68
    %v205 = vunpack.c.l.b16 %v69
    %v206 = vunpack.c.l.b16 %v70
    %v207 = vunpack.c.l.b16 %v71
    %v208 = vunpack.c.l.b16 %v72
    %v209 = vunpack.c.l.b16 %v73
    %v210 = vunpack.c.l.b16 %v74
    %v211 = vunpack.c.l.b16 %v75
    %v212 = vunpack.c.l.b16 %v76
    %v213 = vunpack.c.l.b16 %v77
    %v214 = vunpack.c.l.b16 %v78
    %v215 = vunpack.c.l.b16 %v79
    %v216 = vunpack.c.l.b16 %v80
    %v217 = vunpack.c.l.b16 %v81
    %v218 = vunpack.c.l.b16 %v82
    %v219 = vunpack.c.l.b16 %v83
    %v220 = vunpack.c.l.b16 %v84
    %v221 = vunpack.c.l.b16 %v85
    %v222 = vunpack.c.l.b16 %v86
    %v223 = vunpack.c.l.b16 %v87
    %v224 = vunpack.c.l.b16 %v88
    %v225 = vunpack.c.l.b16 %v89
    %v226 = vunpack.c.l.b16 %v90
    %v227 = vunpack.c.l.b16 %v91
    %v228 = vunpack.c.l.b16 %v92
    %v229 = vunpack.c.l.b16 %v93
    %v230 = vunpack.c.l.b16 %v94
    %v231 = vunpack.c.l.b16 %v95
    %v232 = vunpack.c.l.b16 %v96
    %v233 = vunpack.c.l.b16 %v97
    %v234 = vunpack.c.l.b16 %v98
    %v235 = vunpack.c.l.b16 %v99
    %v236 = vunpack.c.l.b16 %v100
    %v237 = vunpack.c.l.b16 %v101
    %v238 = vunpack.c.l.b16 %v102
    %v239 = vunpack.c.l.b16 %v103
    %v240 = vunpack.c.l.b16 %v104
    %v241 = vunpack.c.l.b16 %v105
    %v242 = vunpack.c.l.b16 %v106
    %v243 = vunpack.c.l.b16 %v107
    %v244 = vunpack.c.l.b16 %v108
    %v245 = vunpack.c.l.b16 %v109
    %v246 = vunpack.c.l.b16 %v110
    %v247 = vunpack.c.l.b16 %v111
    %v248 = vpack.c.b16 %v185, %v184
    %v249 = vpack.c.b16 %v187, %v186
    %v250 = vpack.c.b16 %v189, %v188
    %v251 = vpack.c.b16 %v191, %v190
    %v252 = vpack.c.b16 %v193, %v192
    %v253 = vpack.c.b16 %v195, %v194
    %v254 = vpack.c.b16 %v197, %v196
    %v255 = vpack.c.b16 %v199, %v198
    %v256 = vpack.c.b16 %v201, %v200
    %v257 = vpack.c.b16 %v203, %v202
    %v258 = vpack.c.b16 %v205, %v204
    %v259 = vpack.c.b16 %v207, %v206
    %v260 = vpack.c.b16 %v209, %v208
    %v261 = vpack.c.b16 %v211, %v210
    %v262 = vpack.c.b16 %v213, %v212
    %v263 = vpack.c.b16 %v215, %v214
    %v264 = vpack.c.b16 %v217, %v216
    %v265 = vpack.c.b16 %v219, %v218
    %v266 = vpack.c.b16 %v221, %v220
    %v267 = vpack.c.b16 %v223, %v222
    %v268 = vpack.c.b16 %v225, %v224
    %v269 = vpack.c.b16 %v227, %v226
    %v270 = vpack.c.b16 %v229, %v228
    %v271 = vpack.c.b16 %v231, %v230
    %v272 = vpack.c.b16 %v233, %v232
    %v273 = vpack.c.b16 %v235, %v234
    %v274 = vpack.c.b16 %v237, %v236
    %v275 = vpack.c.b16 %v239, %v238
    %v276 = vpack.c.b16 %v241, %v240
    %v277 = vpack.c.b16 %v243, %v242
    %v278 = vpack.c.b16 %v245, %v244
    %v279 = vpack.c.b16 %v247, %v246
    %v284 = vunpack.c.l.b16 %v112
    %v285 = vunpack.c.l.b16 %v113
    %v286 = vunpack.c.l.b16 %v114
    %v287 = vunpack.c.l.b16 %v115
    %v288 = vpack.c.b16 %v285, %v284
    %v289 = vpack.c.b16 %v287, %v286
    %vm292 = vcmask 261120
    %v294 = vsel %vm292, %v248, 0
    %v297 = vsel %vm292, %v249, 0
    %v300 = vsel %vm292, %v250, 0
    %v303 = vsel %vm292, %v251, 0
    %v306 = vsel %vm292, %v252, 0
    %v309 = vsel %vm292, %v253, 0
    %v312 = vsel %vm292, %v254, 0
    %v315 = vsel %vm292, %v255, 0
    %v318 = vsel %vm292, %v256, 0
    %v321 = vsel %vm292, %v257, 0
    %v324 = vsel %vm292, %v258, 0
    %v327 = vsel %vm292, %v259, 0
    %v330 = vsel %vm292, %v260, 0
    %v333 = vsel %vm292, %v261, 0
    %v336 = vsel %vm292, %v262, 0
    %v339 = vsel %vm292, %v263, 0
    %v342 = vsel %vm292, %v264, 0
    %v345 = vsel %vm292, %v265, 0
    %v348 = vsel %vm292, %v266, 0
    %v351 = vsel %vm292, %v267, 0
    %v354 = vsel %vm292, %v268, 0
    %v357 = vsel %vm292, %v269, 0
    %v360 = vsel %vm292, %v270, 0
    %v363 = vsel %vm292, %v271, 0
    %v366 = vsel %vm292, %v272, 0
    %v369 = vsel %vm292, %v273, 0
    %v372 = vsel %vm292, %v274, 0
    %v375 = vsel %vm292, %v275, 0
    %v378 = vsel %vm292, %v276, 0
    %v381 = vsel %vm292, %v277, 0
    %v384 = vsel %vm292, %v278, 0
    %v387 = vsel %vm292, %v279, 0
    %389 = vmatpush.bf16.msra.mxu0 0
    %390 = vmatpush.bf16.msra.mxu0 0
    %391 = vmatpush.bf16.msra.mxu0 0
    %392 = vmatpush.bf16.msra.mxu0 0
    %393 = vmatpush.bf16.msra.mxu0 0
    %394 = vmatpush.bf16.msra.mxu0 0
    %395 = vmatpush.bf16.msra.mxu0 %v289
    %396 = vmatpush.bf16.msra.mxu0 %v288
    %397 = vmatmul.bf16.gmra.mxu0 %v294
    %v398 = vpop.f32.mrf.mxu0
    %v399 = vadd.f32 %v118, %v398
    %v400 = vpop.f32.mrf.mxu0
    %v401 = vadd.f32 %v118, %v400
    %402 = vmatmul.bf16.gmra.mxu0 %v297
    %v403 = vpop.f32.mrf.mxu0
    %v404 = vadd.f32 %v118, %v403
    %v405 = vpop.f32.mrf.mxu0
    %v406 = vadd.f32 %v118, %v405
    %407 = vmatmul.bf16.gmra.mxu0 %v300
    %v408 = vpop.f32.mrf.mxu0
    %v409 = vadd.f32 %v118, %v408
    %v410 = vpop.f32.mrf.mxu0
    %v411 = vadd.f32 %v118, %v410
    %412 = vmatmul.bf16.gmra.mxu0 %v303
    %v413 = vpop.f32.mrf.mxu0
    %v414 = vadd.f32 %v118, %v413
    %v415 = vpop.f32.mrf.mxu0
    %v416 = vadd.f32 %v118, %v415
    %417 = vmatmul.bf16.gmra.mxu0 %v306
    %v418 = vpop.f32.mrf.mxu0
    %v419 = vadd.f32 %v118, %v418
    %v420 = vpop.f32.mrf.mxu0
    %v421 = vadd.f32 %v118, %v420
    %422 = vmatmul.bf16.gmra.mxu0 %v309
    %v423 = vpop.f32.mrf.mxu0
    %v424 = vadd.f32 %v118, %v423
    %v425 = vpop.f32.mrf.mxu0
    %v426 = vadd.f32 %v118, %v425
    %427 = vmatmul.bf16.gmra.mxu0 %v312
    %v428 = vpop.f32.mrf.mxu0
    %v429 = vadd.f32 %v118, %v428
    %v430 = vpop.f32.mrf.mxu0
    %v431 = vadd.f32 %v118, %v430
    %432 = vmatmul.bf16.gmra.mxu0 %v315
    %v433 = vpop.f32.mrf.mxu0
    %v434 = vadd.f32 %v118, %v433
    %v435 = vpop.f32.mrf.mxu0
    %v436 = vadd.f32 %v118, %v435
    %437 = vmatmul.bf16.gmra.mxu0 %v318
    %v438 = vpop.f32.mrf.mxu0
    %v439 = vadd.f32 %v118, %v438
    %v440 = vpop.f32.mrf.mxu0
    %v441 = vadd.f32 %v118, %v440
    %442 = vmatmul.bf16.gmra.mxu0 %v321
    %v443 = vpop.f32.mrf.mxu0
    %v444 = vadd.f32 %v118, %v443
    %v445 = vpop.f32.mrf.mxu0
    %v446 = vadd.f32 %v118, %v445
    %447 = vmatmul.bf16.gmra.mxu0 %v324
    %v448 = vpop.f32.mrf.mxu0
    %v449 = vadd.f32 %v118, %v448
    %v450 = vpop.f32.mrf.mxu0
    %v451 = vadd.f32 %v118, %v450
    %452 = vmatmul.bf16.gmra.mxu0 %v327
    %v453 = vpop.f32.mrf.mxu0
    %v454 = vadd.f32 %v118, %v453
    %v455 = vpop.f32.mrf.mxu0
    %v456 = vadd.f32 %v118, %v455
    %457 = vmatmul.bf16.gmra.mxu0 %v330
    %v458 = vpop.f32.mrf.mxu0
    %v459 = vadd.f32 %v118, %v458
    %v460 = vpop.f32.mrf.mxu0
    %v461 = vadd.f32 %v118, %v460
    %462 = vmatmul.bf16.gmra.mxu0 %v333
    %v463 = vpop.f32.mrf.mxu0
    %v464 = vadd.f32 %v118, %v463
    %v465 = vpop.f32.mrf.mxu0
    %v466 = vadd.f32 %v118, %v465
    %467 = vmatmul.bf16.gmra.mxu0 %v336
    %v468 = vpop.f32.mrf.mxu0
    %v469 = vadd.f32 %v118, %v468
    %v470 = vpop.f32.mrf.mxu0
    %v471 = vadd.f32 %v118, %v470
    %472 = vmatmul.bf16.gmra.mxu0 %v339
    %v473 = vpop.f32.mrf.mxu0
    %v474 = vadd.f32 %v118, %v473
    %v475 = vpop.f32.mrf.mxu0
    %v476 = vadd.f32 %v118, %v475
    %477 = vmatmul.bf16.gmra.mxu0 %v342
    %v478 = vpop.f32.mrf.mxu0
    %v479 = vadd.f32 %v118, %v478
    %v480 = vpop.f32.mrf.mxu0
    %v481 = vadd.f32 %v118, %v480
    %482 = vmatmul.bf16.gmra.mxu0 %v345
    %v483 = vpop.f32.mrf.mxu0
    %v484 = vadd.f32 %v118, %v483
    %v485 = vpop.f32.mrf.mxu0
    %v486 = vadd.f32 %v118, %v485
    %487 = vmatmul.bf16.gmra.mxu0 %v348
    %v488 = vpop.f32.mrf.mxu0
    %v489 = vadd.f32 %v118, %v488
    %v490 = vpop.f32.mrf.mxu0
    %v491 = vadd.f32 %v118, %v490
    %492 = vmatmul.bf16.gmra.mxu0 %v351
    %v493 = vpop.f32.mrf.mxu0
    %v494 = vadd.f32 %v118, %v493
    %v495 = vpop.f32.mrf.mxu0
    %v496 = vadd.f32 %v118, %v495
    %497 = vmatmul.bf16.gmra.mxu0 %v354
    %v498 = vpop.f32.mrf.mxu0
    %v499 = vadd.f32 %v118, %v498
    %v500 = vpop.f32.mrf.mxu0
    %v501 = vadd.f32 %v118, %v500
    %502 = vmatmul.bf16.gmra.mxu0 %v357
    %v503 = vpop.f32.mrf.mxu0
    %v504 = vadd.f32 %v118, %v503
    %v505 = vpop.f32.mrf.mxu0
    %v506 = vadd.f32 %v118, %v505
    %507 = vmatmul.bf16.gmra.mxu0 %v360
    %v508 = vpop.f32.mrf.mxu0
    %v509 = vadd.f32 %v118, %v508
    %v510 = vpop.f32.mrf.mxu0
    %v511 = vadd.f32 %v118, %v510
    %512 = vmatmul.bf16.gmra.mxu0 %v363
    %v513 = vpop.f32.mrf.mxu0
    %v514 = vadd.f32 %v118, %v513
    %v515 = vpop.f32.mrf.mxu0
    %v516 = vadd.f32 %v118, %v515
    %517 = vmatmul.bf16.gmra.mxu0 %v366
    %v518 = vpop.f32.mrf.mxu0
    %v519 = vadd.f32 %v118, %v518
    %v520 = vpop.f32.mrf.mxu0
    %v521 = vadd.f32 %v118, %v520
    %522 = vmatmul.bf16.gmra.mxu0 %v369
    %v523 = vpop.f32.mrf.mxu0
    %v524 = vadd.f32 %v118, %v523
    %v525 = vpop.f32.mrf.mxu0
    %v526 = vadd.f32 %v118, %v525
    %527 = vmatmul.bf16.gmra.mxu0 %v372
    %v528 = vpop.f32.mrf.mxu0
    %v529 = vadd.f32 %v118, %v528
    %v530 = vpop.f32.mrf.mxu0
    %v531 = vadd.f32 %v118, %v530
    %532 = vmatmul.bf16.gmra.mxu0 %v375
    %v533 = vpop.f32.mrf.mxu0
    %v534 = vadd.f32 %v118, %v533
    %v535 = vpop.f32.mrf.mxu0
    %v536 = vadd.f32 %v118, %v535
    %537 = vmatmul.bf16.gmra.mxu0 %v378
    %v538 = vpop.f32.mrf.mxu0
    %v539 = vadd.f32 %v118, %v538
    %v540 = vpop.f32.mrf.mxu0
    %v541 = vadd.f32 %v118, %v540
    %542 = vmatmul.bf16.gmra.mxu0 %v381
    %v543 = vpop.f32.mrf.mxu0
    %v544 = vadd.f32 %v118, %v543
    %v545 = vpop.f32.mrf.mxu0
    %v546 = vadd.f32 %v118, %v545
    %547 = vmatmul.bf16.gmra.mxu0 %v384
    %v548 = vpop.f32.mrf.mxu0
    %v549 = vadd.f32 %v118, %v548
    %v550 = vpop.f32.mrf.mxu0
    %v551 = vadd.f32 %v118, %v550
    %552 = vmatmul.bf16.gmra.mxu0 %v387
    %v553 = vpop.f32.mrf.mxu0
    %v554 = vadd.f32 %v118, %v553
    %v555 = vpop.f32.mrf.mxu0
    %v556 = vadd.f32 %v118, %v555
    %557 = vdwg.mxu0
    %v558 = vpack.c.bf16 %v399, %v399
    %v559 = vpack.c.bf16 %v401, %v401
    %v560 = vpack.c.bf16 %v404, %v404
    %v561 = vpack.c.bf16 %v406, %v406
    %v562 = vpack.c.bf16 %v409, %v409
    %v563 = vpack.c.bf16 %v411, %v411
    %v564 = vpack.c.bf16 %v414, %v414
    %v565 = vpack.c.bf16 %v416, %v416
    %v566 = vpack.c.bf16 %v419, %v419
    %v567 = vpack.c.bf16 %v421, %v421
    %v568 = vpack.c.bf16 %v424, %v424
    %v569 = vpack.c.bf16 %v426, %v426
    %v570 = vpack.c.bf16 %v429, %v429
    %v571 = vpack.c.bf16 %v431, %v431
    %v572 = vpack.c.bf16 %v434, %v434
    %v573 = vpack.c.bf16 %v436, %v436
    %v574 = vpack.c.bf16 %v439, %v439
    %v575 = vpack.c.bf16 %v441, %v441
    %v576 = vpack.c.bf16 %v444, %v444
    %v577 = vpack.c.bf16 %v446, %v446
    %v578 = vpack.c.bf16 %v449, %v449
    %v579 = vpack.c.bf16 %v451, %v451
    %v580 = vpack.c.bf16 %v454, %v454
    %v581 = vpack.c.bf16 %v456, %v456
    %v582 = vpack.c.bf16 %v459, %v459
    %v583 = vpack.c.bf16 %v461, %v461
    %v584 = vpack.c.bf16 %v464, %v464
    %v585 = vpack.c.bf16 %v466, %v466
    %v586 = vpack.c.bf16 %v469, %v469
    %v587 = vpack.c.bf16 %v471, %v471
    %v588 = vpack.c.bf16 %v474, %v474
    %v589 = vpack.c.bf16 %v476, %v476
    %v590 = vpack.c.bf16 %v479, %v479
    %v591 = vpack.c.bf16 %v481, %v481
    %v592 = vpack.c.bf16 %v484, %v484
    %v593 = vpack.c.bf16 %v486, %v486
    %v594 = vpack.c.bf16 %v489, %v489
    %v595 = vpack.c.bf16 %v491, %v491
    %v596 = vpack.c.bf16 %v494, %v494
    %v597 = vpack.c.bf16 %v496, %v496
    %v598 = vpack.c.bf16 %v499, %v499
    %v599 = vpack.c.bf16 %v501, %v501
    %v600 = vpack.c.bf16 %v504, %v504
    %v601 = vpack.c.bf16 %v506, %v506
    %v602 = vpack.c.bf16 %v509, %v509
    %v603 = vpack.c.bf16 %v511, %v511
    %v604 = vpack.c.bf16 %v514, %v514
    %v605 = vpack.c.bf16 %v516, %v516
    %v606 = vpack.c.bf16 %v519, %v519
    %v607 = vpack.c.bf16 %v521, %v521
    %v608 = vpack.c.bf16 %v524, %v524
    %v609 = vpack.c.bf16 %v526, %v526
    %v610 = vpack.c.bf16 %v529, %v529
    %v611 = vpack.c.bf16 %v531, %v531
    %v612 = vpack.c.bf16 %v534, %v534
    %v613 = vpack.c.bf16 %v536, %v536
    %v614 = vpack.c.bf16 %v539, %v539
    %v615 = vpack.c.bf16 %v541, %v541
    %v616 = vpack.c.bf16 %v544, %v544
    %v617 = vpack.c.bf16 %v546, %v546
    %v618 = vpack.c.bf16 %v549, %v549
    %v619 = vpack.c.bf16 %v551, %v551
    %v620 = vpack.c.bf16 %v554, %v554
    %v621 = vpack.c.bf16 %v556, %v556
    %622 = vst [vmem:[#allocation7] sm:$0xf] %v558
    %623 = vst [vmem:[#allocation7 + $0x4] sm:$0xf] %v559
    %624 = vst [vmem:[#allocation7 + $0x8] sm:$0xf] %v560
    %625 = vst [vmem:[#allocation7 + $0xc] sm:$0xf] %v561
    %626 = vst [vmem:[#allocation7 + $0x10] sm:$0xf] %v562
    %627 = vst [vmem:[#allocation7 + $0x14] sm:$0xf] %v563
    %628 = vst [vmem:[#allocation7 + $0x18] sm:$0xf] %v564
    %629 = vst [vmem:[#allocation7 + $0x1c] sm:$0xf] %v565
    %630 = vst [vmem:[#allocation7 + $0x20] sm:$0xf] %v566
    %631 = vst [vmem:[#allocation7 + $0x24] sm:$0xf] %v567
    %632 = vst [vmem:[#allocation7 + $0x28] sm:$0xf] %v568
    %633 = vst [vmem:[#allocation7 + $0x2c] sm:$0xf] %v569
    %634 = vst [vmem:[#allocation7 + $0x30] sm:$0xf] %v570
    %635 = vst [vmem:[#allocation7 + $0x34] sm:$0xf] %v571
    %636 = vst [vmem:[#allocation7 + $0x38] sm:$0xf] %v572
    %637 = vst [vmem:[#allocation7 + $0x3c] sm:$0xf] %v573
    %638 = vst [vmem:[#allocation7 + $0x40] sm:$0xf] %v574
    %639 = vst [vmem:[#allocation7 + $0x44] sm:$0xf] %v575
    %640 = vst [vmem:[#allocation7 + $0x48] sm:$0xf] %v576
    %641 = vst [vmem:[#allocation7 + $0x4c] sm:$0xf] %v577
    %642 = vst [vmem:[#allocation7 + $0x50] sm:$0xf] %v578
    %643 = vst [vmem:[#allocation7 + $0x54] sm:$0xf] %v579
    %644 = vst [vmem:[#allocation7 + $0x58] sm:$0xf] %v580
    %645 = vst [vmem:[#allocation7 + $0x5c] sm:$0xf] %v581
    %646 = vst [vmem:[#allocation7 + $0x60] sm:$0xf] %v582
    %647 = vst [vmem:[#allocation7 + $0x64] sm:$0xf] %v583
    %648 = vst [vmem:[#allocation7 + $0x68] sm:$0xf] %v584
    %649 = vst [vmem:[#allocation7 + $0x6c] sm:$0xf] %v585
    %650 = vst [vmem:[#allocation7 + $0x70] sm:$0xf] %v586
    %651 = vst [vmem:[#allocation7 + $0x74] sm:$0xf] %v587
    %652 = vst [vmem:[#allocation7 + $0x78] sm:$0xf] %v588
    %653 = vst [vmem:[#allocation7 + $0x7c] sm:$0xf] %v589
    %654 = vst [vmem:[#allocation7 + $0x80] sm:$0xf] %v590
    %655 = vst [vmem:[#allocation7 + $0x84] sm:$0xf] %v591
    %656 = vst [vmem:[#allocation7 + $0x88] sm:$0xf] %v592
    %657 = vst [vmem:[#allocation7 + $0x8c] sm:$0xf] %v593
    %658 = vst [vmem:[#allocation7 + $0x90] sm:$0xf] %v594
    %659 = vst [vmem:[#allocation7 + $0x94] sm:$0xf] %v595
    %660 = vst [vmem:[#allocation7 + $0x98] sm:$0xf] %v596
    %661 = vst [vmem:[#allocation7 + $0x9c] sm:$0xf] %v597
    %662 = vst [vmem:[#allocation7 + $0xa0] sm:$0xf] %v598
    %663 = vst [vmem:[#allocation7 + $0xa4] sm:$0xf] %v599
    %664 = vst [vmem:[#allocation7 + $0xa8] sm:$0xf] %v600
    %665 = vst [vmem:[#allocation7 + $0xac] sm:$0xf] %v601
    %666 = vst [vmem:[#allocation7 + $0xb0] sm:$0xf] %v602
    %667 = vst [vmem:[#allocation7 + $0xb4] sm:$0xf] %v603
    %668 = vst [vmem:[#allocation7 + $0xb8] sm:$0xf] %v604
    %669 = vst [vmem:[#allocation7 + $0xbc] sm:$0xf] %v605
    %670 = vst [vmem:[#allocation7 + $0xc0] sm:$0xf] %v606
    %671 = vst [vmem:[#allocation7 + $0xc4] sm:$0xf] %v607
    %672 = vst [vmem:[#allocation7 + $0xc8] sm:$0xf] %v608
    %673 = vst [vmem:[#allocation7 + $0xcc] sm:$0xf] %v609
    %674 = vst [vmem:[#allocation7 + $0xd0] sm:$0xf] %v610
    %675 = vst [vmem:[#allocation7 + $0xd4] sm:$0xf] %v611
    %676 = vst [vmem:[#allocation7 + $0xd8] sm:$0xf] %v612
    %677 = vst [vmem:[#allocation7 + $0xdc] sm:$0xf] %v613
    %678 = vst [vmem:[#allocation7 + $0xe0] sm:$0xf] %v614
    %679 = vst [vmem:[#allocation7 + $0xe4] sm:$0xf] %v615
    %680 = vst [vmem:[#allocation7 + $0xe8] sm:$0xf] %v616
    %681 = vst [vmem:[#allocation7 + $0xec] sm:$0xf] %v617
    %682 = vst [vmem:[#allocation7 + $0xf0] sm:$0xf] %v618
    %683 = vst [vmem:[#allocation7 + $0xf4] sm:$0xf] %v619
    %684 = vst [vmem:[#allocation7 + $0xf8] sm:$0xf] %v620
    %685 = vst [vmem:[#allocation7 + $0xfc] sm:$0xf] %v621
    // Predicated region
    $region22: #{tpu_custom_call.1} parent=1 // pred_check
      _
    $region23: #{tpu_custom_call.1} parent=1 // pred_check_branch
      %687 = sbr.rel (0) target = $region25
    $region24: #{tpu_custom_call.1} parent=1 // pred_region
      %689 = vsyncadd [#allocation4], 0
      %s690 = sshll.u32 [#allocation7], 4
      %s691 = int_to_ptr.vmem [resolvable:$true] %s690
      %s692 = sshll.u32 %s3, 4
      %s693 = int_to_ptr.hbm [resolvable:$true] %s692
      %698 = dma.vmem_to_hbm [thread:$0]  %s691, 4096, %s693, [#allocation4], 64, 64, 4
    $region25: #{tpu_custom_call.1} parent=1 // pred_fallthru
      _
    // Predicated region
    $region26: #{tpu_custom_call.1} parent=1 // pred_check
      _
    $region27: #{tpu_custom_call.1} parent=1 // pred_check_branch
      %700 = sbr.rel (0) target = $region29
    $region28: #{tpu_custom_call.1} parent=1 // pred_region
      %702 = dma.done [#allocation4], 4096
    $region29: #{tpu_custom_call.1} parent=1 // pred_fallthru
      _
    %703 = vsyncpa [#allocation3], 1
    %704 = vsyncpa [#allocation6], 1
    %705 = vsyncpa [#allocation4], 1

</llo_original>
